<compile_context>
chip_gen: v5e
topology: v5e:2x2
jax: 0.10.0
libtpu: 0.0.40
codegen_flags: <defaults>
</compile_context>

<pallas_src>
import math

import jax
import jax.numpy as jnp
from jax import lax
from jax.experimental import pallas as pl
from jax.experimental.pallas import tpu as pltpu


# ----------------------------------------------------------------------------
# Shared compute helpers (run inside the kernels).
# ----------------------------------------------------------------------------
def _attend_and_project(h_new, hs_f32, wn_c, wn_h, wy):
    """softmax(hs @ h) -> context -> Wy(tanh(Wn([c | h])))."""
    f32 = jnp.float32
    # Lane-dense scores: (B, T) with B packed into sublanes, T along lanes.
    scores = jnp.sum(h_new[:, None, :] * hs_f32, axis=-1)              # (B, T)
    m = jnp.max(scores, axis=-1, keepdims=True)
    e = jnp.exp(scores - m)
    a = e * pl.reciprocal(jnp.sum(e, axis=-1, keepdims=True), approx=True)
    c = jnp.sum(a[:, :, None] * hs_f32, axis=1)                        # (B, H)
    t = jnp.tanh(jnp.dot(c.astype(wn_c.dtype), wn_c, preferred_element_type=f32)
                 + jnp.dot(h_new.astype(wn_h.dtype), wn_h, preferred_element_type=f32))
    return jnp.dot(t.astype(wy.dtype), wy, preferred_element_type=f32)


def _gru_update(gi, gh, h, H):
    """PyTorch GRUCell update from pre-activations gi = y@Wih.T+b_ih, gh = h@Whh.T+b_hh."""
    r = jax.nn.sigmoid(gi[:, :H] + gh[:, :H])
    z = jax.nn.sigmoid(gi[:, H:2 * H] + gh[:, H:2 * H])
    n = jnp.tanh(gi[:, 2 * H:] + r * gh[:, 2 * H:])
    return (1.0 - z) * n + z * h


# ----------------------------------------------------------------------------
# Single-step kernel (module-equivalent forward).
# ----------------------------------------------------------------------------
def attention_cell_kernel(y_ref, h_ref, hs_ref,
                          wih_ref, whh_ref, bih_ref, bhh_ref,
                          wnc_ref, wnh_ref, wy_ref,
                          out_ref, hnew_ref):
    f32 = jnp.float32
    H = h_ref.shape[-1]
    y = y_ref[...]
    h = h_ref[...]
    wih = wih_ref[...]
    whh = whh_ref[...]

    # Fused 3-gate MXU pushes (input side and hidden side), f32 accumulation.
    gi = jnp.dot(y.astype(wih.dtype), wih, preferred_element_type=f32) + bih_ref[...]
    gh = jnp.dot(h.astype(whh.dtype), whh, preferred_element_type=f32) + bhh_ref[...]
    h_new = _gru_update(gi, gh, h, H)

    hs = hs_ref[...].astype(f32)
    out_ref[...] = _attend_and_project(
        h_new, hs, wnc_ref[...], wnh_ref[...], wy_ref[...]).astype(out_ref.dtype)
    hnew_ref[...] = h_new


# ----------------------------------------------------------------------------
# Fused multi-step decode kernel: grid = (batch_blocks, step_chunks).
# Weights / hs resident in VMEM; hidden carry lives in the resident h_fin
# output block; CHUNK steps per grid invocation via an unrolled fori_loop.
# ----------------------------------------------------------------------------
def attention_decode_kernel(gi_ref, h0_ref, hs_ref,
                            whh_ref, bhh_ref,
                            wnc_ref, wnh_ref, wy_ref,
                            out_ref, hfin_ref):
    f32 = jnp.float32
    c_idx = pl.program_id(1)

    @pl.when(c_idx == 0)
    def _():
        hfin_ref[...] = h0_ref[...]          # init carry for this batch block

    H = h0_ref.shape[-1]
    chunk = gi_ref.shape[0]

    hs = hs_ref[...].astype(f32)             # (TB, T, H), resident across steps
    whh = whh_ref[...]                       # (H, 3H), stacked [Whr|Whz|Whn]
    bhh = bhh_ref[...]                       # (1, 3H)
    wnc = wnc_ref[...]
    wnh = wnh_ref[...]
    wy = wy_ref[...]

    def step(k, h):
        gi = gi_ref[k]                                                   # (TB, 3H)
        gh = jnp.dot(h.astype(whh.dtype), whh,
                     preferred_element_type=f32) + bhh                   # one MXU push
        h_new = _gru_update(gi, gh, h, H)
        out_ref[k] = _attend_and_project(h_new, hs, wnc, wnh, wy).astype(out_ref.dtype)
        return h_new

    h = lax.fori_loop(0, chunk, step, hfin_ref[...], unroll=True)
    hfin_ref[...] = h                        # resident block; single HBM writeback


# ----------------------------------------------------------------------------
# Wrapper-side weight preparation: pre-transpose, keep gates stacked, split Wn.
# ----------------------------------------------------------------------------
def _prep_weights(params, H, op_dtype):
    f32 = jnp.float32
    return {
        'Wih_T': params['W_ih'].T.astype(op_dtype),       # (Din, 3H)
        'Whh_T': params['W_hh'].T.astype(op_dtype),       # (H, 3H)
        'b_ih':  params['b_ih'].reshape(1, 3 * H).astype(f32),
        'b_hh':  params['b_hh'].reshape(1, 3 * H).astype(f32),
        'Wn_c':  params['Wn'][:, :H].T.astype(op_dtype),  # (H, H)
        'Wn_h':  params['Wn'][:, H:].T.astype(op_dtype),  # (H, H)
        'Wy':    params['Wy'].T.astype(op_dtype),         # (H, dim_out)
    }


def _nbytes(shape, dtype):
    return math.prod(shape) * jnp.dtype(dtype).itemsize


# ----------------------------------------------------------------------------
# Public wrappers.
# ----------------------------------------------------------------------------
def attention_cell_forward(hs, state, y, params, *, op_dtype=jnp.float32):
    """Single decoder step; mirrors Attention_Cell.forward (GRU cell)."""
    B, T, H = hs.shape
    dim_out = params['Wy'].shape[0]
    p = _prep_weights(params, H, op_dtype)

    vmem = pl.BlockSpec(memory_space=pltpu.MemorySpace.VMEM)
    out, h_new = pl.pallas_call(
        attention_cell_kernel,
        out_shape=(jax.ShapeDtypeStruct((B, dim_out), jnp.float32),
                   jax.ShapeDtypeStruct((B, H), jnp.float32)),
        in_specs=[vmem] * 10,
        out_specs=(vmem, vmem),
    )(y, state.astype(jnp.float32), hs.astype(op_dtype),
      p['Wih_T'], p['Whh_T'], p['b_ih'], p['b_hh'],
      p['Wn_c'], p['Wn_h'], p['Wy'])
    return out, h_new


def attention_cell_decode(hs, state0, ys, params, *, op_dtype=jnp.bfloat16,
                          chunk=4, batch_block=None):
    """Fused decode loop: one pallas_call runs all steps with resident weights."""
    f32 = jnp.float32
    S, B, _ = ys.shape
    _, T, H = hs.shape
    dim_out = params['Wy'].shape[0]
    p = _prep_weights(params, H, op_dtype)

    if batch_block is None:
        batch_block = B
    chunk = max(1, min(chunk, S))
    while S % chunk:                       # chunk must divide S
        chunk -= 1
    assert B % batch_block == 0
    TB, NB, NC = batch_block, B // batch_block, S // chunk

    # Hoist the step-independent input-side GRU projections out of the
    # recurrence, fused into one (S, B, 3H) slab (single DMA stream).
    gi = (jnp.einsum('sbi,ih->sbh', ys.astype(op_dtype), p['Wih_T'],
                     preferred_element_type=f32) + p['b_ih'])
    hs_c = hs.astype(op_dtype)
    h0 = state0.astype(f32)

    in_specs = [
        pl.BlockSpec((chunk, TB, 3 * H), lambda b, c: (c, b, 0)),   # gi (per-chunk tile)
        pl.BlockSpec((TB, H),            lambda b, c: (b, 0)),      # h0
        pl.BlockSpec((TB, T, H),         lambda b, c: (b, 0, 0)),   # hs (resident)
        pl.BlockSpec((H, 3 * H),         lambda b, c: (0, 0)),      # Whh stacked
        pl.BlockSpec((1, 3 * H),         lambda b, c: (0, 0)),      # b_hh
        pl.BlockSpec((H, H),             lambda b, c: (0, 0)),      # Wn_c
        pl.BlockSpec((H, H),             lambda b, c: (0, 0)),      # Wn_h
        pl.BlockSpec((H, dim_out),       lambda b, c: (0, 0)),      # Wy
    ]
    out_specs = (
        pl.BlockSpec((chunk, TB, dim_out), lambda b, c: (c, b, 0)),  # outs (per-chunk)
        pl.BlockSpec((TB, H),              lambda b, c: (b, 0)),     # h_fin (carry)
    )

    # Explicit VMEM budget derived from the resident set (x2 for double buffers).
    resident = 2 * (
        _nbytes((chunk, TB, 3 * H), f32) + _nbytes((chunk, TB, dim_out), f32)
        + _nbytes((TB, T, H), op_dtype) + 2 * _nbytes((TB, H), f32)
        + _nbytes((H, 3 * H), op_dtype) + _nbytes((1, 3 * H), f32)
        + 2 * _nbytes((H, H), op_dtype) + _nbytes((H, dim_out), op_dtype))
    vmem_limit = int(min(max(resident + (4 << 20), 32 << 20), 100 << 20))

    outs, h_fin = pl.pallas_call(
        attention_decode_kernel,
        out_shape=(jax.ShapeDtypeStruct((S, B, dim_out), jnp.float32),
                   jax.ShapeDtypeStruct((B, H), jnp.float32)),
        grid_spec=pltpu.PrefetchScalarGridSpec(
            num_scalar_prefetch=0,
            grid=(NB, NC),
            in_specs=in_specs,
            out_specs=out_specs),
        compiler_params=pltpu.CompilerParams(
            dimension_semantics=("parallel", "arbitrary"),  # batch || , steps sequential
            vmem_limit_bytes=vmem_limit),
    )(gi, h0, hs_c,
      p['Whh_T'], p['b_hh'],
      p['Wn_c'], p['Wn_h'], p['Wy'])
    return outs, h_fin


# ----------------------------------------------------------------------------
# Pure-JAX references mirroring the PyTorch module (GRU cell).  `op_dtype`
# mirrors the kernel's matmul-operand precision so bf16 runs can be checked
# tightly; op_dtype=float32 is the exact module semantics.
# ----------------------------------------------------------------------------
def reference_forward(hs, state, y, params, op_dtype=jnp.float32):
    f32 = jnp.float32
    H = state.shape[1]
    mm = lambda a, b: jnp.dot(a.astype(op_dtype), b.astype(op_dtype),
                              preferred_element_type=f32)
    gi = mm(y, params['W_ih'].T) + params['b_ih']
    gh = mm(state, params['W_hh'].T) + params['b_hh']
    r = jax.nn.sigmoid(gi[:, :H] + gh[:, :H])
    z = jax.nn.sigmoid(gi[:, H:2 * H] + gh[:, H:2 * H])
    n = jnp.tanh(gi[:, 2 * H:] + r * gh[:, 2 * H:])
    h_new = (1.0 - z) * n + z * state
    hs32 = hs.astype(op_dtype).astype(f32)          # matches kernel hs storage dtype
    scores = jnp.einsum('bth,bh->bt', hs32, h_new)  # (B, T)
    a = jax.nn.softmax(scores, axis=-1)
    c = jnp.sum(a[:, :, None] * hs32, axis=1)
    cr = jnp.concatenate([c, h_new], axis=1)
    out = mm(jnp.tanh(mm(cr, params['Wn'].T)), params['Wy'].T)
    return out, h_new


def reference_decode(hs, state0, ys, params, op_dtype=jnp.float32):
    h = state0
    outs = []
    for s in range(ys.shape[0]):
        o, h = reference_forward(hs, h, ys[s], params, op_dtype=op_dtype)
        outs.append(o)
    return jnp.stack(outs, axis=0), h


def init_params(key, dim_in, dim_out, hidden):
    ks = jax.random.split(key, 6)
    k = 1.0 / jnp.sqrt(hidden)
    u = lambda kk, shape: jax.random.uniform(kk, shape, jnp.float32, -k, k)
    return {
        'W_ih': u(ks[0], (3 * hidden, dim_in)),
        'W_hh': u(ks[1], (3 * hidden, hidden)),
        'b_ih': u(ks[2], (3 * hidden,)),
        'b_hh': u(ks[3], (3 * hidden,)),
        'Wn':   u(ks[4], (hidden, 2 * hidden)),   # Linear(2H -> H, bias=False)
        'Wy':   u(ks[5], (dim_out, hidden)),      # Linear(H -> dim_out, bias=False)
    }


if __name__ == "__main__":
    B, T, dim_in, dim_out, hidden, steps = 2, 8, 4, 6, 32, 8

    key = jax.random.PRNGKey(0)
    k_hs, k_state, k_y, k_ys, k_params = jax.random.split(key, 5)

    hs = jax.random.normal(k_hs, (B, T, hidden), jnp.float32)
    state = jax.random.normal(k_state, (B, hidden), jnp.float32)
    y = jax.random.normal(k_y, (B, dim_in), jnp.float32)
    ys = jax.random.normal(k_ys, (steps, B, dim_in), jnp.float32)
    params = init_params(k_params, dim_in, dim_out, hidden)

    # ---- single step, f32 (module-equivalent forward; tight check) ----
    out, new_state = attention_cell_forward(hs, state, y, params, op_dtype=jnp.float32)
    jax.block_until_ready((out, new_state))
    ref_out, ref_state = reference_forward(hs, state, y, params, op_dtype=jnp.float32)
    assert jnp.allclose(new_state, ref_state, atol=1e-5, rtol=1e-5)
    assert jnp.allclose(out, ref_out, atol=2e-3, rtol=2e-3)       # approx-recip softmax

    # ---- fused multi-step decode, f32 ----
    outs, h_fin = attention_cell_decode(hs, state, ys, params,
                                        op_dtype=jnp.float32, chunk=4)
    jax.block_until_ready((outs, h_fin))
    ref_outs, ref_hfin = reference_decode(hs, state, ys, params, op_dtype=jnp.float32)
    assert jnp.allclose(h_fin, ref_hfin, atol=1e-4, rtol=1e-4)
    assert jnp.allclose(outs, ref_outs, atol=2e-3, rtol=2e-3)

    # ---- fused multi-step decode, bf16 matmul operands (perf config) ----
    outs_bf, h_fin_bf = attention_cell_decode(hs, state, ys, params,
                                              op_dtype=jnp.bfloat16, chunk=4)
    jax.block_until_ready((outs_bf, h_fin_bf))
    ref_outs_bf, ref_hfin_bf = reference_decode(hs, state, ys, params,
                                                op_dtype=jnp.bfloat16)
    assert jnp.allclose(h_fin_bf, ref_hfin_bf, atol=2e-3, rtol=2e-3)
    assert jnp.allclose(outs_bf, ref_outs_bf, atol=1e-2, rtol=1e-2)

    print("KERNEL_OK")
</pallas_src>

<mosaic_0001>
module attributes {stable_mosaic.version = 11 : i64} {
  func.func @attention_cell_kernel(%arg0: memref<2x4xf32, #tpu.memory_space<vmem>>, %arg1: memref<2x32xf32, #tpu.memory_space<vmem>>, %arg2: memref<2x8x32xf32, #tpu.memory_space<vmem>>, %arg3: memref<4x96xf32, #tpu.memory_space<vmem>>, %arg4: memref<32x96xf32, #tpu.memory_space<vmem>>, %arg5: memref<1x96xf32, #tpu.memory_space<vmem>>, %arg6: memref<1x96xf32, #tpu.memory_space<vmem>>, %arg7: memref<32x32xf32, #tpu.memory_space<vmem>>, %arg8: memref<32x32xf32, #tpu.memory_space<vmem>>, %arg9: memref<32x6xf32, #tpu.memory_space<vmem>>, %arg10: memref<2x6xf32, #tpu.memory_space<vmem>>, %arg11: memref<2x32xf32, #tpu.memory_space<vmem>>) attributes {dimension_semantics = [], scalar_prefetch = 0 : i64, scratch_operands = 0 : i64, tpu.core_type = #tpu.core_type<tc>} {
    %c0 = arith.constant 0 : index
    %c0_0 = arith.constant 0 : index
    %0 = vector.load %arg0[%c0, %c0_0] : memref<2x4xf32, #tpu.memory_space<vmem>>, vector<2x4xf32>
    %c0_1 = arith.constant 0 : index
    %c0_2 = arith.constant 0 : index
    %1 = vector.load %arg1[%c0_1, %c0_2] : memref<2x32xf32, #tpu.memory_space<vmem>>, vector<2x32xf32>
    %c0_3 = arith.constant 0 : index
    %c0_4 = arith.constant 0 : index
    %2 = vector.load %arg3[%c0_3, %c0_4] : memref<4x96xf32, #tpu.memory_space<vmem>>, vector<4x96xf32>
    %c0_5 = arith.constant 0 : index
    %c0_6 = arith.constant 0 : index
    %3 = vector.load %arg4[%c0_5, %c0_6] : memref<32x96xf32, #tpu.memory_space<vmem>>, vector<32x96xf32>
    %cst = arith.constant dense<0.000000e+00> : vector<2x96xf32>
    %4 = tpu.matmul %0, %2, %cst {dimension_numbers = #tpu.dot_dimension_numbers<[1], [0], [0], [1], [0, 0, 1, 1], [], []>} : vector<2x4xf32>, vector<4x96xf32>, vector<2x96xf32> -> vector<2x96xf32>
    %c0_7 = arith.constant 0 : index
    %c0_8 = arith.constant 0 : index
    %5 = vector.load %arg5[%c0_7, %c0_8] : memref<1x96xf32, #tpu.memory_space<vmem>>, vector<1x96xf32>
    %6 = vector.broadcast %5 : vector<1x96xf32> to vector<2x96xf32>
    %7 = arith.addf %4, %6 : vector<2x96xf32>
    %cst_9 = arith.constant dense<0.000000e+00> : vector<2x96xf32>
    %8 = tpu.matmul %1, %3, %cst_9 {dimension_numbers = #tpu.dot_dimension_numbers<[1], [0], [0], [1], [0, 0, 1, 1], [], []>} : vector<2x32xf32>, vector<32x96xf32>, vector<2x96xf32> -> vector<2x96xf32>
    %c0_10 = arith.constant 0 : index
    %c0_11 = arith.constant 0 : index
    %9 = vector.load %arg6[%c0_10, %c0_11] : memref<1x96xf32, #tpu.memory_space<vmem>>, vector<1x96xf32>
    %10 = vector.broadcast %9 : vector<1x96xf32> to vector<2x96xf32>
    %11 = arith.addf %8, %10 : vector<2x96xf32>
    %12 = vector.extract_strided_slice %7 {offsets = [0, 0], sizes = [2, 32], strides = [1, 1]} : vector<2x96xf32> to vector<2x32xf32>
    %13 = vector.extract_strided_slice %11 {offsets = [0, 0], sizes = [2, 32], strides = [1, 1]} : vector<2x96xf32> to vector<2x32xf32>
    %14 = arith.addf %12, %13 : vector<2x32xf32>
    %15 = arith.negf %14 : vector<2x32xf32>
    %16 = math.exp %15 : vector<2x32xf32>
    %cst_12 = arith.constant 1.000000e+00 : f32
    %17 = vector.broadcast %cst_12 : f32 to vector<2x32xf32>
    %18 = arith.addf %17, %16 : vector<2x32xf32>
    %19 = arith.divf %17, %18 : vector<2x32xf32>
    %20 = vector.extract_strided_slice %7 {offsets = [0, 32], sizes = [2, 32], strides = [1, 1]} : vector<2x96xf32> to vector<2x32xf32>
    %21 = vector.extract_strided_slice %11 {offsets = [0, 32], sizes = [2, 32], strides = [1, 1]} : vector<2x96xf32> to vector<2x32xf32>
    %22 = arith.addf %20, %21 : vector<2x32xf32>
    %23 = arith.negf %22 : vector<2x32xf32>
    %24 = math.exp %23 : vector<2x32xf32>
    %cst_13 = arith.constant 1.000000e+00 : f32
    %25 = vector.broadcast %cst_13 : f32 to vector<2x32xf32>
    %26 = arith.addf %25, %24 : vector<2x32xf32>
    %27 = arith.divf %25, %26 : vector<2x32xf32>
    %28 = vector.extract_strided_slice %7 {offsets = [0, 64], sizes = [2, 32], strides = [1, 1]} : vector<2x96xf32> to vector<2x32xf32>
    %29 = vector.extract_strided_slice %11 {offsets = [0, 64], sizes = [2, 32], strides = [1, 1]} : vector<2x96xf32> to vector<2x32xf32>
    %30 = arith.mulf %19, %29 : vector<2x32xf32>
    %31 = arith.addf %28, %30 : vector<2x32xf32>
    %32 = math.tanh %31 : vector<2x32xf32>
    %cst_14 = arith.constant 1.000000e+00 : f32
    %33 = vector.broadcast %cst_14 : f32 to vector<2x32xf32>
    %34 = arith.subf %33, %27 : vector<2x32xf32>
    %35 = arith.mulf %34, %32 : vector<2x32xf32>
    %36 = arith.mulf %27, %1 : vector<2x32xf32>
    %37 = arith.addf %35, %36 : vector<2x32xf32>
    %c0_15 = arith.constant 0 : index
    %c0_16 = arith.constant 0 : index
    %c0_17 = arith.constant 0 : index
    %38 = vector.load %arg2[%c0_15, %c0_16, %c0_17] : memref<2x8x32xf32, #tpu.memory_space<vmem>>, vector<2x8x32xf32>
    %c0_18 = arith.constant 0 : index
    %c0_19 = arith.constant 0 : index
    %39 = vector.load %arg7[%c0_18, %c0_19] : memref<32x32xf32, #tpu.memory_space<vmem>>, vector<32x32xf32>
    %c0_20 = arith.constant 0 : index
    %c0_21 = arith.constant 0 : index
    %40 = vector.load %arg8[%c0_20, %c0_21] : memref<32x32xf32, #tpu.memory_space<vmem>>, vector<32x32xf32>
    %c0_22 = arith.constant 0 : index
    %c0_23 = arith.constant 0 : index
    %41 = vector.load %arg9[%c0_22, %c0_23] : memref<32x6xf32, #tpu.memory_space<vmem>>, vector<32x6xf32>
    %42 = vector.shape_cast %37 : vector<2x32xf32> to vector<2x1x32xf32>
    %43 = vector.broadcast %42 : vector<2x1x32xf32> to vector<2x8x32xf32>
    %44 = arith.mulf %43, %38 : vector<2x8x32xf32>
    %cst_24 = arith.constant dense<0.000000e+00> : vector<2x8xf32>
    %45 = vector.multi_reduction <add>, %44, %cst_24 [2] : vector<2x8x32xf32> to vector<2x8xf32>
    %cst_25 = arith.constant dense<0xFF800000> : vector<2xf32>
    %46 = vector.multi_reduction <maximumf>, %45, %cst_25 [1] : vector<2x8xf32> to vector<2xf32>
    %47 = vector.shape_cast %46 : vector<2xf32> to vector<2x1xf32>
    %48 = vector.broadcast %47 : vector<2x1xf32> to vector<2x8xf32>
    %49 = arith.subf %45, %48 : vector<2x8xf32>
    %50 = math.exp %49 : vector<2x8xf32>
    %cst_26 = arith.constant dense<0.000000e+00> : vector<2xf32>
    %51 = vector.multi_reduction <add>, %50, %cst_26 [1] : vector<2x8xf32> to vector<2xf32>
    %52 = vector.shape_cast %51 : vector<2xf32> to vector<2x1xf32>
    %53 = tpu.reciprocal %52 {approx = true} : vector<2x1xf32> -> vector<2x1xf32>
    %54 = vector.broadcast %53 : vector<2x1xf32> to vector<2x8xf32>
    %55 = arith.mulf %50, %54 : vector<2x8xf32>
    %56 = vector.shape_cast %55 : vector<2x8xf32> to vector<2x8x1xf32>
    %57 = vector.broadcast %56 : vector<2x8x1xf32> to vector<2x8x32xf32>
    %58 = arith.mulf %57, %38 : vector<2x8x32xf32>
    %cst_27 = arith.constant dense<0.000000e+00> : vector<2x32xf32>
    %59 = vector.multi_reduction <add>, %58, %cst_27 [1] : vector<2x8x32xf32> to vector<2x32xf32>
    %cst_28 = arith.constant dense<0.000000e+00> : vector<2x32xf32>
    %60 = tpu.matmul %59, %39, %cst_28 {dimension_numbers = #tpu.dot_dimension_numbers<[1], [0], [0], [1], [0, 0, 1, 1], [], []>} : vector<2x32xf32>, vector<32x32xf32>, vector<2x32xf32> -> vector<2x32xf32>
    %cst_29 = arith.constant dense<0.000000e+00> : vector<2x32xf32>
    %61 = tpu.matmul %37, %40, %cst_29 {dimension_numbers = #tpu.dot_dimension_numbers<[1], [0], [0], [1], [0, 0, 1, 1], [], []>} : vector<2x32xf32>, vector<32x32xf32>, vector<2x32xf32> -> vector<2x32xf32>
    %62 = arith.addf %60, %61 : vector<2x32xf32>
    %63 = math.tanh %62 : vector<2x32xf32>
    %cst_30 = arith.constant dense<0.000000e+00> : vector<2x6xf32>
    %64 = tpu.matmul %63, %41, %cst_30 {dimension_numbers = #tpu.dot_dimension_numbers<[1], [0], [0], [1], [0, 0, 1, 1], [], []>} : vector<2x32xf32>, vector<32x6xf32>, vector<2x6xf32> -> vector<2x6xf32>
    %c0_31 = arith.constant 0 : index
    %c0_32 = arith.constant 0 : index
    %65 = vector.load %arg10[%c0_31, %c0_32] : memref<2x6xf32, #tpu.memory_space<vmem>>, vector<2x6xf32>
    tpu.vector_store %arg10[%c0_31, %c0_32], %64 {strides = array<i32>} : memref<2x6xf32, #tpu.memory_space<vmem>>, vector<2x6xf32>,
    %c0_33 = arith.constant 0 : index
    %c0_34 = arith.constant 0 : index
    %66 = vector.load %arg11[%c0_33, %c0_34] : memref<2x32xf32, #tpu.memory_space<vmem>>, vector<2x32xf32>
    tpu.vector_store %arg11[%c0_33, %c0_34], %37 {strides = array<i32>} : memref<2x32xf32, #tpu.memory_space<vmem>>, vector<2x32xf32>,
    return
  }
}

</mosaic_0001>

<llo_original>
// kernel: tpu_custom_call.1
$region0: #{tpu_custom_call.1}
  #allocation0 [shape = 'u32[]', space=smem, size = 0x4, offset = 0x4, fixed_abs, tag = 'smem constant byte address 0x4 - core index']
  #allocation1 [shape = 'u32[72,128]{1,0:T(1,128)}', space=vmem, size = 0x9000, scoped, tag = 'internal scratch']
  %s0 = inlined_call_operand.vmem [shape: f32[2,4], index: 0, kind: input, shape index: {}]
  %s1 = inlined_call_operand.vmem [shape: f32[2,32], index: 1, kind: input, shape index: {}]
  %s2 = inlined_call_operand.hbm [shape: f32[2,8,32], index: 2, kind: input, shape index: {}]
  %s3 = inlined_call_operand.vmem [shape: f32[4,96], index: 3, kind: input, shape index: {}]
  %s4 = inlined_call_operand.vmem [shape: f32[32,96], index: 4, kind: input, shape index: {}]
  %s5 = inlined_call_operand.hbm [shape: f32[1,96], index: 5, kind: input, shape index: {}]
  %s6 = inlined_call_operand.hbm [shape: f32[1,96], index: 6, kind: input, shape index: {}]
  %s7 = inlined_call_operand.hbm [shape: f32[32,32], index: 7, kind: input, shape index: {}]
  %s8 = inlined_call_operand.hbm [shape: f32[32,32], index: 8, kind: input, shape index: {}]
  %s9 = inlined_call_operand.vmem [shape: f32[32,6], index: 9, kind: input, shape index: {}]
  %s10 = inlined_call_operand.hbm [shape: f32[2,6], index: 10, kind: output, shape index: {0}]
  %s11 = inlined_call_operand.hbm [shape: f32[2,32], index: 11, kind: output, shape index: {1}]
  %12 = xla_tuple %s10, %s11
  %s13 = sld [smem:[#allocation0]]
  $region78: #{tpu_custom_call.1} parent=0
    _
  %s15 = ssub.s32 1, %s13
  %s16 = scalar_select 0, %s15, %s13
  $region1: #{tpu_custom_call.1} parent=0
    #allocation2 [shape = 'u8[8192]{0}', space=vmem, size = 0x2000, scoped, tag = 'input window, operand 2, single buffered']
    #allocation3 [shape = 's32[1]{0}', space=sflag, size = 0x4, scoped, tag = 'scoped memory for tpu_custom_call.1']
    #allocation4 [shape = 's32[1]{0}', space=sflag, size = 0x4, scoped, tag = 'scoped memory for tpu_custom_call.1']
    #allocation5 [shape = 'u8[512]{0}', space=vmem, size = 0x400, scoped, tag = 'input window, operand 5, single buffered']
    #allocation6 [shape = 's32[1]{0}', space=sflag, size = 0x4, scoped, tag = 'scoped memory for tpu_custom_call.1']
    #allocation7 [shape = 'u8[512]{0}', space=vmem, size = 0x400, scoped, tag = 'input window, operand 6, single buffered']
    #allocation8 [shape = 'u8[16384]{0}', space=vmem, size = 0x4000, scoped, tag = 'input window, operand 7, single buffered']
    #allocation9 [shape = 's32[1]{0}', space=sflag, size = 0x4, scoped, tag = 'scoped memory for tpu_custom_call.1']
    #allocation10 [shape = 'u8[16384]{0}', space=vmem, size = 0x4000, scoped, tag = 'input window, operand 8, single buffered']
    #allocation11 [shape = 'u8[1024]{0}', space=vmem, size = 0x400, scoped, tag = 'output window, operand 0, single buffered']
    #allocation12 [shape = 'u8[1024]{0}', space=vmem, size = 0x400, scoped, tag = 'output window, operand 1, single buffered']
    #allocation13 [shape = 's32[1]{0}', space=sflag, size = 0x4, scoped, tag = 'scoped memory for tpu_custom_call.1']
    %17 = vsyncpa [#allocation3], 0
    %18 = vsyncpa [#allocation6], 0
    %19 = vsyncpa [#allocation9], 0
    %20 = vsyncpa [#allocation4], 0
    %21 = vsyncpa [#allocation13], 0
    // Predicated region
    $region2: #{tpu_custom_call.1} parent=1 // pred_check
      _
    $region3: #{tpu_custom_call.1} parent=1 // pred_check_branch
      %23 = sbr.rel (0) target = $region5
    $region4: #{tpu_custom_call.1} parent=1 // pred_region
      _
    $region5: #{tpu_custom_call.1} parent=1 // pred_fallthru
      _
    // Predicated region
    $region6: #{tpu_custom_call.1} parent=1 // pred_check
      _
    $region7: #{tpu_custom_call.1} parent=1 // pred_check_branch
      %25 = sbr.rel (0) target = $region9
    $region8: #{tpu_custom_call.1} parent=1 // pred_region
      _
    $region9: #{tpu_custom_call.1} parent=1 // pred_fallthru
      _
    // Predicated region
    $region10: #{tpu_custom_call.1} parent=1 // pred_check
      _
    $region11: #{tpu_custom_call.1} parent=1 // pred_check_branch
      %27 = sbr.rel (0) target = $region13
    $region12: #{tpu_custom_call.1} parent=1 // pred_region
      %29 = vsyncadd [#allocation3], 0
      %s30 = sshll.u32 %s2, 4
      %s31 = int_to_ptr.hbm [resolvable:$true] %s30
      %s32 = sshll.u32 [#allocation2], 4
      %s33 = int_to_ptr.vmem [resolvable:$true] %s32
      %38 = dma.hbm_to_vmem [thread:$0]  %s31, 256, %s33, [#allocation3], 128, 128, 8
    $region13: #{tpu_custom_call.1} parent=1 // pred_fallthru
      _
    // Predicated region
    $region14: #{tpu_custom_call.1} parent=1 // pred_check
      _
    $region15: #{tpu_custom_call.1} parent=1 // pred_check_branch
      %40 = sbr.rel (0) target = $region17
    $region16: #{tpu_custom_call.1} parent=1 // pred_region
      _
    $region17: #{tpu_custom_call.1} parent=1 // pred_fallthru
      _
    // Predicated region
    $region18: #{tpu_custom_call.1} parent=1 // pred_check
      _
    $region19: #{tpu_custom_call.1} parent=1 // pred_check_branch
      %42 = sbr.rel (0) target = $region21
    $region20: #{tpu_custom_call.1} parent=1 // pred_region
      _
    $region21: #{tpu_custom_call.1} parent=1 // pred_fallthru
      _
    // Predicated region
    $region22: #{tpu_custom_call.1} parent=1 // pred_check
      _
    $region23: #{tpu_custom_call.1} parent=1 // pred_check_branch
      %44 = sbr.rel (0) target = $region25
    $region24: #{tpu_custom_call.1} parent=1 // pred_region
      %46 = vsyncadd [#allocation6], 0
      %s48 = sshll.u32 %s5, 4
      %s49 = int_to_ptr.hbm [resolvable:$true] %s48
      %s50 = sshll.u32 [#allocation5], 4
      %s51 = int_to_ptr.vmem [resolvable:$true] %s50
      %53 = dma.hbm_to_vmem [thread:$0]  %s49, 16, %s51, [#allocation6]
    $region25: #{tpu_custom_call.1} parent=1 // pred_fallthru
      _
    // Predicated region
    $region26: #{tpu_custom_call.1} parent=1 // pred_check
      _
    $region27: #{tpu_custom_call.1} parent=1 // pred_check_branch
      %55 = sbr.rel (0) target = $region29
    $region28: #{tpu_custom_call.1} parent=1 // pred_region
      %57 = vsyncadd [#allocation6], 0
      %s59 = sshll.u32 %s6, 4
      %s60 = int_to_ptr.hbm [resolvable:$true] %s59
      %s61 = sshll.u32 [#allocation7], 4
      %s62 = int_to_ptr.vmem [resolvable:$true] %s61
      %64 = dma.hbm_to_vmem [thread:$0]  %s60, 16, %s62, [#allocation6]
    $region29: #{tpu_custom_call.1} parent=1 // pred_fallthru
      _
    // Predicated region
    $region30: #{tpu_custom_call.1} parent=1 // pred_check
      _
    $region31: #{tpu_custom_call.1} parent=1 // pred_check_branch
      %66 = sbr.rel (0) target = $region33
    $region32: #{tpu_custom_call.1} parent=1 // pred_region
      %68 = vsyncadd [#allocation9], 0
      %s69 = sshll.u32 %s7, 4
      %s70 = int_to_ptr.hbm [resolvable:$true] %s69
      %s71 = sshll.u32 [#allocation8], 4
      %s72 = int_to_ptr.vmem [resolvable:$true] %s71
      %77 = dma.hbm_to_vmem [thread:$0]  %s70, 512, %s72, [#allocation9], 128, 128, 8
    $region33: #{tpu_custom_call.1} parent=1 // pred_fallthru
      _
    // Predicated region
    $region34: #{tpu_custom_call.1} parent=1 // pred_check
      _
    $region35: #{tpu_custom_call.1} parent=1 // pred_check_branch
      %79 = sbr.rel (0) target = $region37
    $region36: #{tpu_custom_call.1} parent=1 // pred_region
      %81 = vsyncadd [#allocation9], 0
      %s82 = sshll.u32 %s8, 4
      %s83 = int_to_ptr.hbm [resolvable:$true] %s82
      %s84 = sshll.u32 [#allocation10], 4
      %s85 = int_to_ptr.vmem [resolvable:$true] %s84
      %90 = dma.hbm_to_vmem [thread:$0]  %s83, 512, %s85, [#allocation9], 128, 128, 8
    $region37: #{tpu_custom_call.1} parent=1 // pred_fallthru
      _
    // Predicated region
    $region38: #{tpu_custom_call.1} parent=1 // pred_check
      _
    $region39: #{tpu_custom_call.1} parent=1 // pred_check_branch
      %92 = sbr.rel (0) target = $region41
    $region40: #{tpu_custom_call.1} parent=1 // pred_region
      _
    $region41: #{tpu_custom_call.1} parent=1 // pred_fallthru
      _
    // Predicated region
    $region42: #{tpu_custom_call.1} parent=1 // pred_check
      _
    $region43: #{tpu_custom_call.1} parent=1 // pred_check_branch
      %94 = sbr.rel (0) target = $region45
    $region44: #{tpu_custom_call.1} parent=1 // pred_region
      %96 = dma.done [#allocation3], 256
    $region45: #{tpu_custom_call.1} parent=1 // pred_fallthru
      _
    // Predicated region
    $region46: #{tpu_custom_call.1} parent=1 // pred_check
      _
    $region47: #{tpu_custom_call.1} parent=1 // pred_check_branch
      %98 = sbr.rel (0) target = $region49
    $region48: #{tpu_custom_call.1} parent=1 // pred_region
      %100 = dma.done [#allocation6], 16
    $region49: #{tpu_custom_call.1} parent=1 // pred_fallthru
      _
    // Predicated region
    $region50: #{tpu_custom_call.1} parent=1 // pred_check
      _
    $region51: #{tpu_custom_call.1} parent=1 // pred_check_branch
      %102 = sbr.rel (0) target = $region53
    $region52: #{tpu_custom_call.1} parent=1 // pred_region
      %104 = dma.done [#allocation6], 16
    $region53: #{tpu_custom_call.1} parent=1 // pred_fallthru
      _
    // Predicated region
    $region54: #{tpu_custom_call.1} parent=1 // pred_check
      _
    $region55: #{tpu_custom_call.1} parent=1 // pred_check_branch
      %106 = sbr.rel (0) target = $region57
    $region56: #{tpu_custom_call.1} parent=1 // pred_region
      %108 = dma.done [#allocation9], 512
    $region57: #{tpu_custom_call.1} parent=1 // pred_fallthru
      _
    // Predicated region
    $region58: #{tpu_custom_call.1} parent=1 // pred_check
      _
    $region59: #{tpu_custom_call.1} parent=1 // pred_check_branch
      %110 = sbr.rel (0) target = $region61
    $region60: #{tpu_custom_call.1} parent=1 // pred_region
      %112 = dma.done [#allocation9], 512
    $region61: #{tpu_custom_call.1} parent=1 // pred_fallthru
      _
    %v113 = vld [vmem:[%s0] sm:$0x3]
    %v114 = vld [vmem:[%s1] sm:$0x3]
    %v115 = vld [vmem:[%s3] sm:$0xf]
    %v116 = vld [vmem:[%s4] sm:$0xff]
    %v117 = vld [vmem:[%s4 + $0x8] sm:$0xff]
    %v118 = vld [vmem:[%s4 + $0x10] sm:$0xff]
    %v119 = vld [vmem:[%s4 + $0x18] sm:$0xff]
    %v120 = vld [vmem:[#allocation5] sm:$0x1]
    %v122 = vperm.slane %v120, 0
    %vm124 = vcmask 31744
    %v126 = vsel %vm124, %v113, 0
    %vm128 = vcmask 1043456
    %v130 = vsel %vm128, %v115, 0
    %132 = vmatpush.msra.mxu0 0.0
    %133 = vmatpush.msra.mxu0 0.0
    %134 = vmatpush.msra.mxu0 0.0
    %135 = vmatpush.msra.mxu0 0.0
    %136 = vmatpush.msra.mxu0 0.0
    %137 = vmatpush.msra.mxu0 0.0
    %138 = vmatpush.msra.mxu0 0.0
    %139 = vmatpush.msra.mxu0 0.0
    %140 = vmatpush.msra.mxu0 0.0
    %141 = vmatpush.msra.mxu0 0.0
    %142 = vmatpush.msra.mxu0 0.0
    %143 = vmatpush.msra.mxu0 0.0
    %144 = vmatpush.msra.mxu0 0.0
    %145 = vmatpush.msra.mxu0 0.0
    %146 = vmatpush.msra.mxu0 0.0
    %147 = vmatpush.msra.mxu0 %v130
    %148 = vmatmul.f32.gmra.mxu0 %v126
    %v149 = vpop.f32.mrf.mxu0
    %v150 = vadd.f32 %v122, %v149
    %151 = vdwg.mxu0
    %v152 = vld [vmem:[#allocation7] sm:$0x1]
    %v154 = vperm.slane %v152, 0
    %vm156 = vcmask 261120
    %v158 = vsel %vm156, %v114, 0
    %160 = vmatpush.msra.mxu0 0.0
    %161 = vmatpush.msra.mxu0 0.0
    %162 = vmatpush.msra.mxu0 0.0
    %163 = vmatpush.msra.mxu0 0.0
    %164 = vmatpush.msra.mxu0 0.0
    %165 = vmatpush.msra.mxu0 0.0
    %166 = vmatpush.msra.mxu0 0.0
    %167 = vmatpush.msra.mxu0 0.0
    %168 = vmatpush.msra.mxu0 0.0
    %169 = vmatpush.msra.mxu0 0.0
    %170 = vmatpush.msra.mxu0 0.0
    %171 = vmatpush.msra.mxu0 0.0
    %172 = vmatpush.msra.mxu0 %v119
    %173 = vmatpush.msra.mxu0 %v118
    %174 = vmatpush.msra.mxu0 %v117
    %175 = vmatpush.msra.mxu0 %v116
    %176 = vmatmul.f32.gmra.mxu0 %v158
    %v177 = vpop.f32.mrf.mxu0
    %v178 = vadd.f32 %v154, %v177
    %179 = vdwg.mxu0
    %v180 = vadd.f32 %v150, %v178
    %v181 = vxor.u32 %v180, 2147483648
    %v182 = vmul.f32 %v181, 1.442695
    %v183 = vpow.pop %v182
    %v184 = vadd.f32 %v183, 1.0
    %v185 = vrcp.pop %v184
    %v186 = vmul.f32 %v184, %v185
    %v187 = vsub.f32 1.0, %v186
    %v188 = vmul.f32 %v185, %v187
    %v189 = vadd.f32 %v185, %v188
    %vm190 = vweird.f32 %v184
    %vm191 = vweird.f32 %v185
    %vm192 = vmor %vm190, %vm191
    %v193 = vsel %vm192, %v185, %v189
    %v194 = vand.u32 2147483647, %v184
    %vm195 = vcmp.eq.f32.partialorder %v194, 8.507059e+37
    %v196 = vand.u32 %v184, 2147483648
    %v197 = vor.u32 1.1754944e-38, %v196
    %v198 = vsel %vm195, %v197, %v193
    %v199 = vmul.f32 1.0, %v198
    %201 = vrot.lane.b32.xlu0 %v178, 64
    %v202 = vpop.permute.xlu0 %201
    %v204 = vmul.f32 %v199, %v202
    %206 = vrot.lane.b32.xlu0 %v204, 64
    %v207 = vpop.permute.xlu0 %206
    %v209 = vadd.f32 %v150, %v207
    %v210 = vtanh.pop %v209
    %v211 = vsub.f32 1.0, %v199
    %213 = vrot.lane.b32.xlu0 %v210, 96
    %v214 = vpop.permute.xlu0 %213
    %v216 = vmul.f32 %v211, %v214
    %217 = vrot.lane.b32.xlu0 %v114, 32
    %v218 = vpop.permute.xlu0 %217
    %v220 = vmul.f32 %v199, %v218
    %v221 = vadd.f32 %v216, %v220
    %v222 = vld [vmem:[#allocation2] sm:$0xff]
    %v223 = vld [vmem:[#allocation2 + $0x8] sm:$0xff]
    %v224 = vld [vmem:[#allocation8] sm:$0xff]
    %v225 = vld [vmem:[#allocation8 + $0x8] sm:$0xff]
    %v226 = vld [vmem:[#allocation8 + $0x10] sm:$0xff]
    %v227 = vld [vmem:[#allocation8 + $0x18] sm:$0xff]
    %v228 = vld [vmem:[#allocation10] sm:$0xff]
    %v229 = vld [vmem:[#allocation10 + $0x8] sm:$0xff]
    %v230 = vld [vmem:[#allocation10 + $0x10] sm:$0xff]
    %v231 = vld [vmem:[#allocation10 + $0x18] sm:$0xff]
    %v232 = vld [vmem:[%s9] sm:$0xff]
    %v233 = vld [vmem:[%s9 + $0x8] sm:$0xff]
    %v234 = vld [vmem:[%s9 + $0x10] sm:$0xff]
    %v235 = vld [vmem:[%s9 + $0x18] sm:$0xff]
    %v237 = vrot.slane %v221, 1
    %v238 = vperm.slane %v221, 0
    %v239 = vperm.slane %v237, 0
    %244 = vrot.lane.b32.xlu0 %v222, 32
    %v245 = vpop.permute.xlu0 %244
    %246 = vrot.lane.b32.xlu0 %v223, 32
    %v247 = vpop.permute.xlu0 %246
    %v250 = vmul.f32 %v238, %v245
    %v251 = vmul.f32 %v239, %v247
    %254 = vrot.lane.b32.xlu0 %v250, 96
    %v255 = vpop.permute.xlu0 %254
    %256 = vrot.lane.b32.xlu0 %v251, 96
    %v257 = vpop.permute.xlu0 %256
    %v260 = vsel %vm156, %v255, 0.0
    %261 = vadd.xlane.f32.xlu0 %v260
    %v262 = vpop.xlane.xlu0 %261
    %v263 = vsel %vm156, %v257, 0.0
    %264 = vadd.xlane.f32.xlu0 %v263
    %v265 = vpop.xlane.xlu0 %264
    %v268 = vlaneseq
    %v269 = vand.u32 %v268, 127
    %v270 = vperm.slane %v262, %v269
    %v271 = vperm.slane %v265, %v269
    %vm272 = vcmask 1041409
    %v273 = vsel %vm272, %v271, %v270
    %vm275 = vcmask 58368
    %v276 = vsel %vm275, %v273, -inf
    %277 = vmax.xlane.f32.xlu0 %v276
    %v278 = vpop.xlane.xlu0 %277
    %v280 = vperm.slane %v278, 0
    %v281 = vperm.slane %v278, 1
    %v284 = vsub.f32 %v262, %v280
    %v285 = vsub.f32 %v265, %v281
    %v286 = vmul.f32 %v284, 1.442695
    %v287 = vpow.pop %v286
    %v288 = vmul.f32 %v285, 1.442695
    %v289 = vpow.pop %v288
    %292 = vset.pattern.permute.xlu0 0
    %293 = vperm.xlu0 %292, %v287
    %v294 = vpop.permute.xlu0 %293
    %295 = vset.pattern.permute.xlu0 0
    %296 = vperm.xlu0 %295, %v289
    %v297 = vpop.permute.xlu0 %296
    %v298 = vperm.slane %v294, %v269
    %v299 = vperm.slane %v297, %v269
    %v300 = vsel %vm272, %v299, %v298
    %v302 = vsel %vm275, %v300, 0.0
    %303 = vadd.xlane.f32.xlu0 %v302
    %v304 = vpop.xlane.xlu0 %303
    %v305 = vrcp.pop %v304
    %v307 = vperm.slane %v305, 0
    %v308 = vperm.slane %v305, 1
    %v311 = vmul.f32 %v287, %v307
    %v312 = vmul.f32 %v289, %v308
    %314 = vset.pattern.permute.xlu0 0
    %315 = vperm.xlu0 %314, %v311
    %v316 = vpop.permute.xlu0 %315
    %319 = vset.pattern.permute.xlu0 0
    %320 = vperm.xlu0 %319, %v312
    %v321 = vpop.permute.xlu0 %320
    %v323 = vmul.f32 %v316, %v222
    %v324 = vmul.f32 %v321, %v223
    %v325 = vsel %vm156, %v323, 0.0
    %v326 = vrot.slane %v325, 4
    %v327 = vadd.f32 %v325, %v326
    %v328 = vrot.slane %v327, 2
    %v329 = vadd.f32 %v327, %v328
    %v330 = vrot.slane %v329, 1
    %v331 = vadd.f32 %v329, %v330
    %v332 = vsel %vm156, %v324, 0.0
    %v333 = vrot.slane %v332, 4
    %v334 = vadd.f32 %v332, %v333
    %v335 = vrot.slane %v334, 2
    %v336 = vadd.f32 %v334, %v335
    %v337 = vrot.slane %v336, 1
    %v338 = vadd.f32 %v336, %v337
    %339 = vrot.lane.b32.xlu0 %v221, 96
    %v340 = vpop.permute.xlu0 %339
    %v341 = vsel %vm156, %v340, 0
    %343 = vmatpush.msra.mxu0 0.0
    %344 = vmatpush.msra.mxu0 0.0
    %345 = vmatpush.msra.mxu0 0.0
    %346 = vmatpush.msra.mxu0 0.0
    %347 = vmatpush.msra.mxu0 0.0
    %348 = vmatpush.msra.mxu0 0.0
    %349 = vmatpush.msra.mxu0 0.0
    %350 = vmatpush.msra.mxu0 0.0
    %351 = vmatpush.msra.mxu0 0.0
    %352 = vmatpush.msra.mxu0 0.0
    %353 = vmatpush.msra.mxu0 0.0
    %354 = vmatpush.msra.mxu0 0.0
    %355 = vmatpush.msra.mxu0 %v231
    %356 = vmatpush.msra.mxu0 %v230
    %357 = vmatpush.msra.mxu0 %v229
    %358 = vmatpush.msra.mxu0 %v228
    %359 = vmatmul.f32.gmra.mxu0 %v341
    %v360 = vpop.f32.mrf.mxu0
    %v361 = vadd.f32 0.0, %v360
    %362 = vdwg.mxu0
    %v365 = vsel %vm272, %v338, %v331
    %v366 = vsel %vm156, %v365, 0
    %368 = vmatpush.msra.mxu0 0.0
    %369 = vmatpush.msra.mxu0 0.0
    %370 = vmatpush.msra.mxu0 0.0
    %371 = vmatpush.msra.mxu0 0.0
    %372 = vmatpush.msra.mxu0 0.0
    %373 = vmatpush.msra.mxu0 0.0
    %374 = vmatpush.msra.mxu0 0.0
    %375 = vmatpush.msra.mxu0 0.0
    %376 = vmatpush.msra.mxu0 0.0
    %377 = vmatpush.msra.mxu0 0.0
    %378 = vmatpush.msra.mxu0 0.0
    %379 = vmatpush.msra.mxu0 0.0
    %380 = vmatpush.msra.mxu0 %v227
    %381 = vmatpush.msra.mxu0 %v226
    %382 = vmatpush.msra.mxu0 %v225
    %383 = vmatpush.msra.mxu0 %v224
    %384 = vmatmul.f32.gmra.mxu0 %v366
    %v385 = vpop.f32.mrf.mxu0
    %v386 = vadd.f32 %v361, %v385
    %387 = vdwg.mxu0
    %v388 = vtanh.pop %v386
    %v390 = vsel %vm156, %v388, 0
    %392 = vmatpush.msra.mxu0 0.0
    %393 = vmatpush.msra.mxu0 0.0
    %394 = vmatpush.msra.mxu0 0.0
    %395 = vmatpush.msra.mxu0 0.0
    %396 = vmatpush.msra.mxu0 0.0
    %397 = vmatpush.msra.mxu0 0.0
    %398 = vmatpush.msra.mxu0 0.0
    %399 = vmatpush.msra.mxu0 0.0
    %400 = vmatpush.msra.mxu0 0.0
    %401 = vmatpush.msra.mxu0 0.0
    %402 = vmatpush.msra.mxu0 0.0
    %403 = vmatpush.msra.mxu0 0.0
    %404 = vmatpush.msra.mxu0 %v235
    %405 = vmatpush.msra.mxu0 %v234
    %406 = vmatpush.msra.mxu0 %v233
    %407 = vmatpush.msra.mxu0 %v232
    %408 = vmatmul.f32.gmra.mxu0 %v390
    %v409 = vpop.f32.mrf.mxu0
    %v410 = vadd.f32 0.0, %v409
    %411 = vdwg.mxu0
    %vm412 = vcmask 41984
    %413 = vst.msk [vmem:[#allocation11] sm:$0x3] %vm412, %v410
    %vm415 = vcmask 254976
    %416 = vst.msk [vmem:[#allocation12] sm:$0x3] %vm415, %v340
    // Predicated region
    $region62: #{tpu_custom_call.1} parent=1 // pred_check
      _
    $region63: #{tpu_custom_call.1} parent=1 // pred_check_branch
      %418 = sbr.rel (0) target = $region65
    $region64: #{tpu_custom_call.1} parent=1 // pred_region
      %420 = vsyncadd [#allocation4], 0
      %s422 = sshll.u32 [#allocation11], 4
      %s423 = int_to_ptr.vmem [resolvable:$true] %s422
      %s424 = sshll.u32 %s10, 4
      %s425 = int_to_ptr.hbm [resolvable:$true] %s424
      %427 = dma.vmem_to_hbm [thread:$0]  %s423, 32, %s425, [#allocation4]
    $region65: #{tpu_custom_call.1} parent=1 // pred_fallthru
      _
    // Predicated region
    $region66: #{tpu_custom_call.1} parent=1 // pred_check
      _
    $region67: #{tpu_custom_call.1} parent=1 // pred_check_branch
      %429 = sbr.rel (0) target = $region69
    $region68: #{tpu_custom_call.1} parent=1 // pred_region
      %431 = vsyncadd [#allocation13], 0
      %s433 = sshll.u32 [#allocation12], 4
      %s434 = int_to_ptr.vmem [resolvable:$true] %s433
      %s435 = sshll.u32 %s11, 4
      %s436 = int_to_ptr.hbm [resolvable:$true] %s435
      %438 = dma.vmem_to_hbm [thread:$0]  %s434, 32, %s436, [#allocation13]
    $region69: #{tpu_custom_call.1} parent=1 // pred_fallthru
      _
    // Predicated region
    $region70: #{tpu_custom_call.1} parent=1 // pred_check
      _
    $region71: #{tpu_custom_call.1} parent=1 // pred_check_branch
      %440 = sbr.rel (0) target = $region73
    $region72: #{tpu_custom_call.1} parent=1 // pred_region
      %442 = dma.done [#allocation4], 32
    $region73: #{tpu_custom_call.1} parent=1 // pred_fallthru
      _
    // Predicated region
    $region74: #{tpu_custom_call.1} parent=1 // pred_check
      _
    $region75: #{tpu_custom_call.1} parent=1 // pred_check_branch
      %444 = sbr.rel (0) target = $region77
    $region76: #{tpu_custom_call.1} parent=1 // pred_region
      %446 = dma.done [#allocation13], 32
    $region77: #{tpu_custom_call.1} parent=1 // pred_fallthru
      _
    %447 = vsyncpa [#allocation3], 1
    %448 = vsyncpa [#allocation6], 1
    %449 = vsyncpa [#allocation9], 1
    %450 = vsyncpa [#allocation4], 1
    %451 = vsyncpa [#allocation13], 1

</llo_original>
